<compile_context>
chip_gen: v6e
topology: v6e:2x2x1
jax: 0.10.0
libtpu: 0.0.40
codegen_flags: <defaults>
</compile_context>

<pallas_src>
import functools
import math

import jax
import jax.numpy as jnp
from jax.experimental import pallas as pl
from jax.experimental.pallas import tpu as pltpu

GROUP_SIZE = 16                         # 2-bit codes per group == codes per packed int32 word
SUB_K = GROUP_SIZE * GROUP_SIZE         # 256: repack unit (16 words x 16 bit-fields)
MAX_TK = 4 * SUB_K                      # 1024: K codes streamed per grid step
MAX_TN = 512                            # N tile: lane-dense multiple of 128
MAX_TM = 512                            # M tile


def _round_up(a, b):
    return (a + b - 1) // b * b


# ---------------------------------------------------------------------------
# Plain-JAX ports of the PyTorch quantization helpers (setup / reference only).
# ---------------------------------------------------------------------------
def block_quantize_2bit(x_flat, group_size=GROUP_SIZE):
    x = x_flat.reshape(-1, group_size)
    # NOTE: an all-zero group gives norm == 0 -> NaN, exactly like the torch code.
    norm = jnp.max(jnp.abs(x), axis=-1, keepdims=True)
    x_norm = (x + norm) / (2.0 * norm)
    xq = jnp.clip(jnp.round(x_norm * 3.0), 0, 3).astype(jnp.uint8)
    packed = (xq[:, 0::4] | (xq[:, 1::4] << 2) | (xq[:, 2::4] << 4) | (xq[:, 3::4] << 6))
    return packed, norm.astype(jnp.float16)


def block_dequantize_2bit_ref(xq, norm):
    norm = norm.astype(jnp.float32)
    parts = [(xq.astype(jnp.int32) >> (2 * i)) & 3 for i in range(4)]
    codes = jnp.stack(parts, axis=-1).reshape(xq.shape[0], xq.shape[1] * 4).astype(jnp.float32)
    return (codes / 3.0) * 2.0 * norm - norm


def _unpack_codes(weight_q2, out_features, in_features):
    """Module packed bytes (O*I/16, 4) -> per-weight 2-bit codes (O, I) int32."""
    wq_b = weight_q2.reshape(out_features, in_features // 4).astype(jnp.int32)
    parts = [(wq_b >> (2 * s)) & 3 for s in range(4)]      # code of column 4*j + s
    return jnp.stack(parts, axis=-1).reshape(out_features, in_features)


# ---------------------------------------------------------------------------
# One-time parameter repack (plays the role of the module's _load hook).
# ---------------------------------------------------------------------------
def prepare_linear2bit_params(weight_q2, weight_norm, bias, shape, group_size=GROUP_SIZE):
    """Repack the module's buffers into the kernel layout.

    Returns (wq_words, scale_t, bias_p, meta):
      wq_words : (K_pad//16, N_pad) int32    K-major packed 2-bit codes
      scale_t  : (K_pad//16, N_pad) bfloat16 per-group 2*norm/3   (offset is folded: w=(q-1.5)*scale)
      bias_p   : (1, N_pad)         float32
    """
    out_features, in_features = shape
    assert group_size == GROUP_SIZE, "packing scheme assumes 16 codes per int32 word"
    assert in_features % group_size == 0
    O, I = out_features, in_features

    # Tile sizes: as large as practical, but not grotesquely larger than the problem.
    TN = min(MAX_TN, _round_up(O, 256))         # multiple of 128 -> lane-dense output/weight tiles
    K_BLOCK = min(MAX_TK, _round_up(I, SUB_K))  # multiple of the 256-code repack unit

    N_pad = _round_up(O, TN)
    K_pad = _round_up(I, K_BLOCK)

    codes = _unpack_codes(weight_q2, O, I)                                   # (O, I) in {0..3}
    norm = weight_norm.astype(jnp.float32).reshape(O, I // group_size)       # (O, I/16)
    scale = norm * (2.0 / 3.0)

    # K-major, padded (pad codes with 0 AND scale with 0 -> padded weights are exactly 0).
    codes_t = jnp.zeros((K_pad, N_pad), jnp.int32).at[:I, :O].set(codes.T)
    scale_t = (jnp.zeros((K_pad // group_size, N_pad), jnp.float32)
               .at[:I // group_size, :O].set(scale.T)).astype(jnp.bfloat16)
    bias_f = jnp.zeros((O,), jnp.float32) if bias is None else bias.astype(jnp.float32)
    bias_p = jnp.zeros((1, N_pad), jnp.float32).at[0, :O].set(bias_f)

    # Re-pack: within each 256-code unit, int32 word g (g in [0,16)) holds the code of
    # k_local = 16*t + g in bits [2t, 2t+2).  So bit-field t == quantization group t of the unit,
    # and scale row (16*unit + t) is a plain row broadcast in-kernel.
    c = codes_t.reshape(K_pad // SUB_K, group_size, group_size, N_pad)       # (unit, t, g, n)
    words = jnp.zeros((K_pad // SUB_K, group_size, N_pad), jnp.int32)
    for t in range(group_size):
        words = words | (c[:, t] << (2 * t))
    wq_words = words.reshape(K_pad // group_size, N_pad)

    meta = dict(O=O, I=I, N_pad=N_pad, K_pad=K_pad, TN=TN, K_BLOCK=K_BLOCK)
    return wq_words, scale_t, bias_p, meta


# ---------------------------------------------------------------------------
# Pallas kernel: in-VMEM 2-bit unpack + dequant + bf16 MXU matmul + bias.
# ---------------------------------------------------------------------------
def _linear2bit_kernel(x_ref, wq_ref, scale_ref, bias_ref, o_ref, w_ref,
                       *, n_subtiles, compute_dtype):
    # x_ref     (tm, K_BLOCK)      bf16   activations (one K block)
    # wq_ref    (K_BLOCK//16, TN)  int32  row 16*u + g: code(k_local = 256*u + 16*t + g) at bits [2t, 2t+2)
    # scale_ref (K_BLOCK//16, TN)  bf16   row 16*u + t: 2*norm/3 of quant group t of unit u
    # bias_ref  (1, TN)            f32
    # o_ref     (tm, TN)           f32    resident across the K grid axis (direct accumulator)
    # w_ref     (K_BLOCK, TN)      bf16   VMEM scratch: dequantized weight block
    k = pl.program_id(2)

    @pl.when(k == 0)
    def _init():
        o_ref[...] = jnp.broadcast_to(bias_ref[...], o_ref.shape)

    # Decode packed codes -> bf16 weights, storing each 16-row piece straight into VMEM
    # scratch (bounded vreg live range, no 16-way concatenate).  Dequant uses the exact
    # identity w = norm*(2q/3 - 1) = (q - 1.5) * (2*norm/3); (q - 1.5) is exact in bf16,
    # so the only extra rounding is the bf16 scale itself.
    for u in range(n_subtiles):
        p = wq_ref[pl.ds(GROUP_SIZE * u, GROUP_SIZE), :]                     # (16, TN) int32
        for t in range(GROUP_SIZE):
            q = ((p >> (2 * t)) & 3).astype(compute_dtype)                   # (16, TN)
            s = scale_ref[pl.ds(GROUP_SIZE * u + t, 1), :].astype(compute_dtype)   # (1, TN)
            w_t = (q - 1.5) * s
            w_ref[pl.ds(SUB_K * u + GROUP_SIZE * t, GROUP_SIZE), :] = w_t.astype(jnp.bfloat16)

    o_ref[...] += jnp.dot(x_ref[...], w_ref[...], preferred_element_type=jnp.float32)


def _default_dequant_dtype():
    """bf16 dequant math on chips with a bf16 VPU (v6e / v7x), f32 on v5-class and older."""
    try:
        kind = jax.devices()[0].device_kind.lower()
    except Exception:
        return jnp.bfloat16
    if any(tag in kind for tag in ("v2", "v3", "v4", "v5")):
        return jnp.float32
    return jnp.bfloat16


def linear2bit_forward(x, prepared, dequant_dtype=None):
    wq_words, scale_t, bias_p, meta = prepared
    O, I = meta["O"], meta["I"]
    N_pad, K_pad = meta["N_pad"], meta["K_pad"]
    TN, K_BLOCK = meta["TN"], meta["K_BLOCK"]
    if dequant_dtype is None:
        dequant_dtype = _default_dequant_dtype()

    lead = x.shape[:-1]
    assert x.shape[-1] == I
    M = math.prod(lead) if lead else 1

    # Large M tile (amortizes the per-tile weight decode), multiple of 16 for bf16 sublanes.
    tm = min(MAX_TM, _round_up(M, 16))
    M_pad = _round_up(M, tm)

    x2 = x.reshape(M, I).astype(jnp.bfloat16)
    if M_pad == M and K_pad == I:
        x_p = x2                                             # skip the HBM pad round-trip
    else:
        x_p = jnp.zeros((M_pad, K_pad), jnp.bfloat16).at[:M, :I].set(x2)

    grid = (M_pad // tm, N_pad // TN, K_pad // K_BLOCK)
    kernel = functools.partial(_linear2bit_kernel,
                               n_subtiles=K_BLOCK // SUB_K,
                               compute_dtype=dequant_dtype)

    out = pl.pallas_call(
        kernel,
        out_shape=jax.ShapeDtypeStruct((M_pad, N_pad), jnp.float32),
        grid=grid,
        in_specs=[
            pl.BlockSpec((tm, K_BLOCK), lambda i, j, k: (i, k)),                   # x
            pl.BlockSpec((K_BLOCK // GROUP_SIZE, TN), lambda i, j, k: (k, j)),     # packed 2-bit codes
            pl.BlockSpec((K_BLOCK // GROUP_SIZE, TN), lambda i, j, k: (k, j)),     # bf16 scales
            pl.BlockSpec((1, TN), lambda i, j, k: (0, j)),                         # bias
        ],
        out_specs=pl.BlockSpec((tm, TN), lambda i, j, k: (i, j)),
        scratch_shapes=[pltpu.VMEM((K_BLOCK, TN), jnp.bfloat16)],                  # dequantized W block
        compiler_params=pltpu.CompilerParams(
            dimension_semantics=("parallel", "parallel", "arbitrary"),
            vmem_limit_bytes=32 * 1024 * 1024,
        ),
    )(x_p, wq_words, scale_t, bias_p)

    return out[:M, :O].reshape(*lead, O)


if __name__ == "__main__":
    # Small shapes consistent with the module: in_features=32, out_features=16,
    # x of shape (batch=2, seq=8, in_features=32).
    in_features, out_features = 32, 16
    batch, seq = 2, 8
    key = jax.random.PRNGKey(0)
    kw, kb, kx = jax.random.split(key, 3)

    # "Full precision" weight, then quantize it (what the module's _load hook does).
    w_full = jax.random.normal(kw, (out_features, in_features), dtype=jnp.float32)
    weight_q2, weight_norm = block_quantize_2bit(w_full.reshape(-1), GROUP_SIZE)
    bias = 0.1 * jax.random.normal(kb, (out_features,), dtype=jnp.float32)
    x = jax.random.normal(kx, (batch, seq, in_features), dtype=jnp.float32)

    prepared = prepare_linear2bit_params(weight_q2, weight_norm, bias,
                                         (out_features, in_features), GROUP_SIZE)
    dq_dtype = _default_dequant_dtype()
    y = linear2bit_forward(x, prepared, dequant_dtype=dq_dtype)
    y = jax.block_until_ready(y)
    assert y.shape == (batch, seq, out_features)

    # --- check 1 (tight): mirror exactly what the kernel computes numerically ---
    # bf16 scale stream, (q - 1.5)*scale dequant in the kernel's compute dtype, bf16
    # MXU operands, f32 accumulation.
    codes = _unpack_codes(weight_q2, out_features, in_features)
    norm_f = weight_norm.astype(jnp.float32).reshape(out_features, in_features // GROUP_SIZE)
    scale_b = (norm_f * (2.0 / 3.0)).astype(jnp.bfloat16)              # what the kernel streams
    scale_full = jnp.repeat(scale_b, GROUP_SIZE, axis=1).astype(dq_dtype)
    q_full = codes.astype(dq_dtype)
    w_kern = ((q_full - 1.5) * scale_full).astype(jnp.bfloat16).astype(jnp.float32)
    x_bf = x.astype(jnp.bfloat16).astype(jnp.float32)
    y_tight = jnp.einsum("bsi,oi->bso", x_bf, w_kern,
                         precision=jax.lax.Precision.HIGHEST) + bias
    assert jnp.allclose(y, y_tight, atol=1e-2, rtol=1e-2), "mismatch vs bf16-exact reference"

    # --- check 2 (loose): full-f32 module reference; difference is purely the
    # bf16 rounding of activations / scales / dequantized weights on the MXU path.
    w_deq = block_dequantize_2bit_ref(weight_q2, weight_norm).reshape(out_features, in_features)
    y_ref = jnp.einsum("bsi,oi->bso", x, w_deq,
                       precision=jax.lax.Precision.HIGHEST) + bias
    assert jnp.allclose(y, y_ref, atol=3e-1, rtol=5e-2), "mismatch vs f32 module reference"

    print("KERNEL_OK")
</pallas_src>

<mosaic_0001>
module attributes {stable_mosaic.version = 11 : i64} {
  func.func @_linear2bit_kernel(%arg0: i32, %arg1: i32, %arg2: i32, %arg3: memref<16x256xbf16, #tpu.memory_space<vmem>>, %arg4: memref<16x256xi32, #tpu.memory_space<vmem>>, %arg5: memref<16x256xbf16, #tpu.memory_space<vmem>>, %arg6: memref<1x256xf32, #tpu.memory_space<vmem>>, %arg7: memref<16x256xf32, #tpu.memory_space<vmem>>, %arg8: memref<256x256xbf16, #tpu.memory_space<vmem>>) attributes {dimension_semantics = [#tpu.dimension_semantics<parallel>, #tpu.dimension_semantics<parallel>, #tpu.dimension_semantics<arbitrary>], iteration_bounds = array<i64: 1, 1, 1>, scalar_prefetch = 0 : i64, scratch_operands = 1 : i64, tpu.core_type = #tpu.core_type<tc>, window_params = [{transform_indices = @transform_0, window_bounds = array<i64: 16, 256>}, {transform_indices = @transform_1, window_bounds = array<i64: 16, 256>}, {transform_indices = @transform_2, window_bounds = array<i64: 16, 256>}, {transform_indices = @transform_3, window_bounds = array<i64: 1, 256>}, {transform_indices = @transform_4, window_bounds = array<i64: 16, 256>}]} {
    %c0_i32 = arith.constant 0 : i32
    %0 = arith.cmpi eq, %arg2, %c0_i32 : i32
    %1 = arith.extui %0 : i1 to i32
    %c0_i32_0 = arith.constant 0 : i32
    %2 = arith.cmpi ne, %1, %c0_i32_0 : i32
    scf.if %2 {
      %c0_76 = arith.constant 0 : index
      %c0_77 = arith.constant 0 : index
      %186 = vector.load %arg6[%c0_76, %c0_77] : memref<1x256xf32, #tpu.memory_space<vmem>>, vector<1x256xf32>
      %187 = vector.shape_cast %186 : vector<1x256xf32> to vector<1x256xf32>
      %188 = vector.broadcast %187 : vector<1x256xf32> to vector<16x256xf32>
      %c0_78 = arith.constant 0 : index
      %c0_79 = arith.constant 0 : index
      %189 = vector.load %arg7[%c0_78, %c0_79] : memref<16x256xf32, #tpu.memory_space<vmem>>, vector<16x256xf32>
      tpu.vector_store %arg7[%c0_78, %c0_79], %188 {strides = array<i32>} : memref<16x256xf32, #tpu.memory_space<vmem>>, vector<16x256xf32>,
    } else {
    }
    %c0 = arith.constant 0 : index
    %c0_1 = arith.constant 0 : index
    %3 = vector.load %arg4[%c0, %c0_1] : memref<16x256xi32, #tpu.memory_space<vmem>>, vector<16x256xi32>
    %c0_i32_2 = arith.constant 0 : i32
    %4 = vector.broadcast %c0_i32_2 : i32 to vector<16x256xi32>
    %5 = arith.shrsi %3, %4 : vector<16x256xi32>
    %c3_i32 = arith.constant 3 : i32
    %6 = vector.broadcast %c3_i32 : i32 to vector<16x256xi32>
    %7 = arith.andi %5, %6 : vector<16x256xi32>
    %8 = arith.sitofp %7 : vector<16x256xi32> to vector<16x256xbf16>
    %c0_3 = arith.constant 0 : index
    %c0_4 = arith.constant 0 : index
    %9 = vector.load %arg5[%c0_3, %c0_4] : memref<16x256xbf16, #tpu.memory_space<vmem>>, vector<1x256xbf16>
    %cst = arith.constant 1.500000e+00 : bf16
    %10 = vector.broadcast %cst : bf16 to vector<16x256xbf16>
    %11 = arith.subf %8, %10 : vector<16x256xbf16>
    %12 = vector.broadcast %9 : vector<1x256xbf16> to vector<16x256xbf16>
    %13 = arith.mulf %11, %12 : vector<16x256xbf16>
    %c0_5 = arith.constant 0 : index
    %c0_6 = arith.constant 0 : index
    %14 = vector.load %arg8[%c0_5, %c0_6] : memref<256x256xbf16, #tpu.memory_space<vmem>>, vector<16x256xbf16>
    tpu.vector_store %arg8[%c0_5, %c0_6], %13 {strides = array<i32>} : memref<256x256xbf16, #tpu.memory_space<vmem>>, vector<16x256xbf16>,
    %c2_i32 = arith.constant 2 : i32
    %15 = vector.broadcast %c2_i32 : i32 to vector<16x256xi32>
    %16 = arith.shrsi %3, %15 : vector<16x256xi32>
    %c3_i32_7 = arith.constant 3 : i32
    %17 = vector.broadcast %c3_i32_7 : i32 to vector<16x256xi32>
    %18 = arith.andi %16, %17 : vector<16x256xi32>
    %19 = arith.sitofp %18 : vector<16x256xi32> to vector<16x256xbf16>
    %c1 = arith.constant 1 : index
    %c0_8 = arith.constant 0 : index
    %20 = vector.load %arg5[%c1, %c0_8] : memref<16x256xbf16, #tpu.memory_space<vmem>>, vector<1x256xbf16>
    %cst_9 = arith.constant 1.500000e+00 : bf16
    %21 = vector.broadcast %cst_9 : bf16 to vector<16x256xbf16>
    %22 = arith.subf %19, %21 : vector<16x256xbf16>
    %23 = vector.broadcast %20 : vector<1x256xbf16> to vector<16x256xbf16>
    %24 = arith.mulf %22, %23 : vector<16x256xbf16>
    %c16 = arith.constant 16 : index
    %c0_10 = arith.constant 0 : index
    %25 = vector.load %arg8[%c16, %c0_10] : memref<256x256xbf16, #tpu.memory_space<vmem>>, vector<16x256xbf16>
    tpu.vector_store %arg8[%c16, %c0_10], %24 {strides = array<i32>} : memref<256x256xbf16, #tpu.memory_space<vmem>>, vector<16x256xbf16>,
    %c4_i32 = arith.constant 4 : i32
    %26 = vector.broadcast %c4_i32 : i32 to vector<16x256xi32>
    %27 = arith.shrsi %3, %26 : vector<16x256xi32>
    %c3_i32_11 = arith.constant 3 : i32
    %28 = vector.broadcast %c3_i32_11 : i32 to vector<16x256xi32>
    %29 = arith.andi %27, %28 : vector<16x256xi32>
    %30 = arith.sitofp %29 : vector<16x256xi32> to vector<16x256xbf16>
    %c2 = arith.constant 2 : index
    %c0_12 = arith.constant 0 : index
    %31 = vector.load %arg5[%c2, %c0_12] : memref<16x256xbf16, #tpu.memory_space<vmem>>, vector<1x256xbf16>
    %cst_13 = arith.constant 1.500000e+00 : bf16
    %32 = vector.broadcast %cst_13 : bf16 to vector<16x256xbf16>
    %33 = arith.subf %30, %32 : vector<16x256xbf16>
    %34 = vector.broadcast %31 : vector<1x256xbf16> to vector<16x256xbf16>
    %35 = arith.mulf %33, %34 : vector<16x256xbf16>
    %c32 = arith.constant 32 : index
    %c0_14 = arith.constant 0 : index
    %36 = vector.load %arg8[%c32, %c0_14] : memref<256x256xbf16, #tpu.memory_space<vmem>>, vector<16x256xbf16>
    tpu.vector_store %arg8[%c32, %c0_14], %35 {strides = array<i32>} : memref<256x256xbf16, #tpu.memory_space<vmem>>, vector<16x256xbf16>,
    %c6_i32 = arith.constant 6 : i32
    %37 = vector.broadcast %c6_i32 : i32 to vector<16x256xi32>
    %38 = arith.shrsi %3, %37 : vector<16x256xi32>
    %c3_i32_15 = arith.constant 3 : i32
    %39 = vector.broadcast %c3_i32_15 : i32 to vector<16x256xi32>
    %40 = arith.andi %38, %39 : vector<16x256xi32>
    %41 = arith.sitofp %40 : vector<16x256xi32> to vector<16x256xbf16>
    %c3 = arith.constant 3 : index
    %c0_16 = arith.constant 0 : index
    %42 = vector.load %arg5[%c3, %c0_16] : memref<16x256xbf16, #tpu.memory_space<vmem>>, vector<1x256xbf16>
    %cst_17 = arith.constant 1.500000e+00 : bf16
    %43 = vector.broadcast %cst_17 : bf16 to vector<16x256xbf16>
    %44 = arith.subf %41, %43 : vector<16x256xbf16>
    %45 = vector.broadcast %42 : vector<1x256xbf16> to vector<16x256xbf16>
    %46 = arith.mulf %44, %45 : vector<16x256xbf16>
    %c48 = arith.constant 48 : index
    %c0_18 = arith.constant 0 : index
    %47 = vector.load %arg8[%c48, %c0_18] : memref<256x256xbf16, #tpu.memory_space<vmem>>, vector<16x256xbf16>
    tpu.vector_store %arg8[%c48, %c0_18], %46 {strides = array<i32>} : memref<256x256xbf16, #tpu.memory_space<vmem>>, vector<16x256xbf16>,
    %c8_i32 = arith.constant 8 : i32
    %48 = vector.broadcast %c8_i32 : i32 to vector<16x256xi32>
    %49 = arith.shrsi %3, %48 : vector<16x256xi32>
    %c3_i32_19 = arith.constant 3 : i32
    %50 = vector.broadcast %c3_i32_19 : i32 to vector<16x256xi32>
    %51 = arith.andi %49, %50 : vector<16x256xi32>
    %52 = arith.sitofp %51 : vector<16x256xi32> to vector<16x256xbf16>
    %c4 = arith.constant 4 : index
    %c0_20 = arith.constant 0 : index
    %53 = vector.load %arg5[%c4, %c0_20] : memref<16x256xbf16, #tpu.memory_space<vmem>>, vector<1x256xbf16>
    %cst_21 = arith.constant 1.500000e+00 : bf16
    %54 = vector.broadcast %cst_21 : bf16 to vector<16x256xbf16>
    %55 = arith.subf %52, %54 : vector<16x256xbf16>
    %56 = vector.broadcast %53 : vector<1x256xbf16> to vector<16x256xbf16>
    %57 = arith.mulf %55, %56 : vector<16x256xbf16>
    %c64 = arith.constant 64 : index
    %c0_22 = arith.constant 0 : index
    %58 = vector.load %arg8[%c64, %c0_22] : memref<256x256xbf16, #tpu.memory_space<vmem>>, vector<16x256xbf16>
    tpu.vector_store %arg8[%c64, %c0_22], %57 {strides = array<i32>} : memref<256x256xbf16, #tpu.memory_space<vmem>>, vector<16x256xbf16>,
    %c10_i32 = arith.constant 10 : i32
    %59 = vector.broadcast %c10_i32 : i32 to vector<16x256xi32>
    %60 = arith.shrsi %3, %59 : vector<16x256xi32>
    %c3_i32_23 = arith.constant 3 : i32
    %61 = vector.broadcast %c3_i32_23 : i32 to vector<16x256xi32>
    %62 = arith.andi %60, %61 : vector<16x256xi32>
    %63 = arith.sitofp %62 : vector<16x256xi32> to vector<16x256xbf16>
    %c5 = arith.constant 5 : index
    %c0_24 = arith.constant 0 : index
    %64 = vector.load %arg5[%c5, %c0_24] : memref<16x256xbf16, #tpu.memory_space<vmem>>, vector<1x256xbf16>
    %cst_25 = arith.constant 1.500000e+00 : bf16
    %65 = vector.broadcast %cst_25 : bf16 to vector<16x256xbf16>
    %66 = arith.subf %63, %65 : vector<16x256xbf16>
    %67 = vector.broadcast %64 : vector<1x256xbf16> to vector<16x256xbf16>
    %68 = arith.mulf %66, %67 : vector<16x256xbf16>
    %c80 = arith.constant 80 : index
    %c0_26 = arith.constant 0 : index
    %69 = vector.load %arg8[%c80, %c0_26] : memref<256x256xbf16, #tpu.memory_space<vmem>>, vector<16x256xbf16>
    tpu.vector_store %arg8[%c80, %c0_26], %68 {strides = array<i32>} : memref<256x256xbf16, #tpu.memory_space<vmem>>, vector<16x256xbf16>,
    %c12_i32 = arith.constant 12 : i32
    %70 = vector.broadcast %c12_i32 : i32 to vector<16x256xi32>
    %71 = arith.shrsi %3, %70 : vector<16x256xi32>
    %c3_i32_27 = arith.constant 3 : i32
    %72 = vector.broadcast %c3_i32_27 : i32 to vector<16x256xi32>
    %73 = arith.andi %71, %72 : vector<16x256xi32>
    %74 = arith.sitofp %73 : vector<16x256xi32> to vector<16x256xbf16>
    %c6 = arith.constant 6 : index
    %c0_28 = arith.constant 0 : index
    %75 = vector.load %arg5[%c6, %c0_28] : memref<16x256xbf16, #tpu.memory_space<vmem>>, vector<1x256xbf16>
    %cst_29 = arith.constant 1.500000e+00 : bf16
    %76 = vector.broadcast %cst_29 : bf16 to vector<16x256xbf16>
    %77 = arith.subf %74, %76 : vector<16x256xbf16>
    %78 = vector.broadcast %75 : vector<1x256xbf16> to vector<16x256xbf16>
    %79 = arith.mulf %77, %78 : vector<16x256xbf16>
    %c96 = arith.constant 96 : index
    %c0_30 = arith.constant 0 : index
    %80 = vector.load %arg8[%c96, %c0_30] : memref<256x256xbf16, #tpu.memory_space<vmem>>, vector<16x256xbf16>
    tpu.vector_store %arg8[%c96, %c0_30], %79 {strides = array<i32>} : memref<256x256xbf16, #tpu.memory_space<vmem>>, vector<16x256xbf16>,
    %c14_i32 = arith.constant 14 : i32
    %81 = vector.broadcast %c14_i32 : i32 to vector<16x256xi32>
    %82 = arith.shrsi %3, %81 : vector<16x256xi32>
    %c3_i32_31 = arith.constant 3 : i32
    %83 = vector.broadcast %c3_i32_31 : i32 to vector<16x256xi32>
    %84 = arith.andi %82, %83 : vector<16x256xi32>
    %85 = arith.sitofp %84 : vector<16x256xi32> to vector<16x256xbf16>
    %c7 = arith.constant 7 : index
    %c0_32 = arith.constant 0 : index
    %86 = vector.load %arg5[%c7, %c0_32] : memref<16x256xbf16, #tpu.memory_space<vmem>>, vector<1x256xbf16>
    %cst_33 = arith.constant 1.500000e+00 : bf16
    %87 = vector.broadcast %cst_33 : bf16 to vector<16x256xbf16>
    %88 = arith.subf %85, %87 : vector<16x256xbf16>
    %89 = vector.broadcast %86 : vector<1x256xbf16> to vector<16x256xbf16>
    %90 = arith.mulf %88, %89 : vector<16x256xbf16>
    %c112 = arith.constant 112 : index
    %c0_34 = arith.constant 0 : index
    %91 = vector.load %arg8[%c112, %c0_34] : memref<256x256xbf16, #tpu.memory_space<vmem>>, vector<16x256xbf16>
    tpu.vector_store %arg8[%c112, %c0_34], %90 {strides = array<i32>} : memref<256x256xbf16, #tpu.memory_space<vmem>>, vector<16x256xbf16>,
    %c16_i32 = arith.constant 16 : i32
    %92 = vector.broadcast %c16_i32 : i32 to vector<16x256xi32>
    %93 = arith.shrsi %3, %92 : vector<16x256xi32>
    %c3_i32_35 = arith.constant 3 : i32
    %94 = vector.broadcast %c3_i32_35 : i32 to vector<16x256xi32>
    %95 = arith.andi %93, %94 : vector<16x256xi32>
    %96 = arith.sitofp %95 : vector<16x256xi32> to vector<16x256xbf16>
    %c8 = arith.constant 8 : index
    %c0_36 = arith.constant 0 : index
    %97 = vector.load %arg5[%c8, %c0_36] : memref<16x256xbf16, #tpu.memory_space<vmem>>, vector<1x256xbf16>
    %cst_37 = arith.constant 1.500000e+00 : bf16
    %98 = vector.broadcast %cst_37 : bf16 to vector<16x256xbf16>
    %99 = arith.subf %96, %98 : vector<16x256xbf16>
    %100 = vector.broadcast %97 : vector<1x256xbf16> to vector<16x256xbf16>
    %101 = arith.mulf %99, %100 : vector<16x256xbf16>
    %c128 = arith.constant 128 : index
    %c0_38 = arith.constant 0 : index
    %102 = vector.load %arg8[%c128, %c0_38] : memref<256x256xbf16, #tpu.memory_space<vmem>>, vector<16x256xbf16>
    tpu.vector_store %arg8[%c128, %c0_38], %101 {strides = array<i32>} : memref<256x256xbf16, #tpu.memory_space<vmem>>, vector<16x256xbf16>,
    %c18_i32 = arith.constant 18 : i32
    %103 = vector.broadcast %c18_i32 : i32 to vector<16x256xi32>
    %104 = arith.shrsi %3, %103 : vector<16x256xi32>
    %c3_i32_39 = arith.constant 3 : i32
    %105 = vector.broadcast %c3_i32_39 : i32 to vector<16x256xi32>
    %106 = arith.andi %104, %105 : vector<16x256xi32>
    %107 = arith.sitofp %106 : vector<16x256xi32> to vector<16x256xbf16>
    %c9 = arith.constant 9 : index
    %c0_40 = arith.constant 0 : index
    %108 = vector.load %arg5[%c9, %c0_40] : memref<16x256xbf16, #tpu.memory_space<vmem>>, vector<1x256xbf16>
    %cst_41 = arith.constant 1.500000e+00 : bf16
    %109 = vector.broadcast %cst_41 : bf16 to vector<16x256xbf16>
    %110 = arith.subf %107, %109 : vector<16x256xbf16>
    %111 = vector.broadcast %108 : vector<1x256xbf16> to vector<16x256xbf16>
    %112 = arith.mulf %110, %111 : vector<16x256xbf16>
    %c144 = arith.constant 144 : index
    %c0_42 = arith.constant 0 : index
    %113 = vector.load %arg8[%c144, %c0_42] : memref<256x256xbf16, #tpu.memory_space<vmem>>, vector<16x256xbf16>
    tpu.vector_store %arg8[%c144, %c0_42], %112 {strides = array<i32>} : memref<256x256xbf16, #tpu.memory_space<vmem>>, vector<16x256xbf16>,
    %c20_i32 = arith.constant 20 : i32
    %114 = vector.broadcast %c20_i32 : i32 to vector<16x256xi32>
    %115 = arith.shrsi %3, %114 : vector<16x256xi32>
    %c3_i32_43 = arith.constant 3 : i32
    %116 = vector.broadcast %c3_i32_43 : i32 to vector<16x256xi32>
    %117 = arith.andi %115, %116 : vector<16x256xi32>
    %118 = arith.sitofp %117 : vector<16x256xi32> to vector<16x256xbf16>
    %c10 = arith.constant 10 : index
    %c0_44 = arith.constant 0 : index
    %119 = vector.load %arg5[%c10, %c0_44] : memref<16x256xbf16, #tpu.memory_space<vmem>>, vector<1x256xbf16>
    %cst_45 = arith.constant 1.500000e+00 : bf16
    %120 = vector.broadcast %cst_45 : bf16 to vector<16x256xbf16>
    %121 = arith.subf %118, %120 : vector<16x256xbf16>
    %122 = vector.broadcast %119 : vector<1x256xbf16> to vector<16x256xbf16>
    %123 = arith.mulf %121, %122 : vector<16x256xbf16>
    %c160 = arith.constant 160 : index
    %c0_46 = arith.constant 0 : index
    %124 = vector.load %arg8[%c160, %c0_46] : memref<256x256xbf16, #tpu.memory_space<vmem>>, vector<16x256xbf16>
    tpu.vector_store %arg8[%c160, %c0_46], %123 {strides = array<i32>} : memref<256x256xbf16, #tpu.memory_space<vmem>>, vector<16x256xbf16>,
    %c22_i32 = arith.constant 22 : i32
    %125 = vector.broadcast %c22_i32 : i32 to vector<16x256xi32>
    %126 = arith.shrsi %3, %125 : vector<16x256xi32>
    %c3_i32_47 = arith.constant 3 : i32
    %127 = vector.broadcast %c3_i32_47 : i32 to vector<16x256xi32>
    %128 = arith.andi %126, %127 : vector<16x256xi32>
    %129 = arith.sitofp %128 : vector<16x256xi32> to vector<16x256xbf16>
    %c11 = arith.constant 11 : index
    %c0_48 = arith.constant 0 : index
    %130 = vector.load %arg5[%c11, %c0_48] : memref<16x256xbf16, #tpu.memory_space<vmem>>, vector<1x256xbf16>
    %cst_49 = arith.constant 1.500000e+00 : bf16
    %131 = vector.broadcast %cst_49 : bf16 to vector<16x256xbf16>
    %132 = arith.subf %129, %131 : vector<16x256xbf16>
    %133 = vector.broadcast %130 : vector<1x256xbf16> to vector<16x256xbf16>
    %134 = arith.mulf %132, %133 : vector<16x256xbf16>
    %c176 = arith.constant 176 : index
    %c0_50 = arith.constant 0 : index
    %135 = vector.load %arg8[%c176, %c0_50] : memref<256x256xbf16, #tpu.memory_space<vmem>>, vector<16x256xbf16>
    tpu.vector_store %arg8[%c176, %c0_50], %134 {strides = array<i32>} : memref<256x256xbf16, #tpu.memory_space<vmem>>, vector<16x256xbf16>,
    %c24_i32 = arith.constant 24 : i32
    %136 = vector.broadcast %c24_i32 : i32 to vector<16x256xi32>
    %137 = arith.shrsi %3, %136 : vector<16x256xi32>
    %c3_i32_51 = arith.constant 3 : i32
    %138 = vector.broadcast %c3_i32_51 : i32 to vector<16x256xi32>
    %139 = arith.andi %137, %138 : vector<16x256xi32>
    %140 = arith.sitofp %139 : vector<16x256xi32> to vector<16x256xbf16>
    %c12 = arith.constant 12 : index
    %c0_52 = arith.constant 0 : index
    %141 = vector.load %arg5[%c12, %c0_52] : memref<16x256xbf16, #tpu.memory_space<vmem>>, vector<1x256xbf16>
    %cst_53 = arith.constant 1.500000e+00 : bf16
    %142 = vector.broadcast %cst_53 : bf16 to vector<16x256xbf16>
    %143 = arith.subf %140, %142 : vector<16x256xbf16>
    %144 = vector.broadcast %141 : vector<1x256xbf16> to vector<16x256xbf16>
    %145 = arith.mulf %143, %144 : vector<16x256xbf16>
    %c192 = arith.constant 192 : index
    %c0_54 = arith.constant 0 : index
    %146 = vector.load %arg8[%c192, %c0_54] : memref<256x256xbf16, #tpu.memory_space<vmem>>, vector<16x256xbf16>
    tpu.vector_store %arg8[%c192, %c0_54], %145 {strides = array<i32>} : memref<256x256xbf16, #tpu.memory_space<vmem>>, vector<16x256xbf16>,
    %c26_i32 = arith.constant 26 : i32
    %147 = vector.broadcast %c26_i32 : i32 to vector<16x256xi32>
    %148 = arith.shrsi %3, %147 : vector<16x256xi32>
    %c3_i32_55 = arith.constant 3 : i32
    %149 = vector.broadcast %c3_i32_55 : i32 to vector<16x256xi32>
    %150 = arith.andi %148, %149 : vector<16x256xi32>
    %151 = arith.sitofp %150 : vector<16x256xi32> to vector<16x256xbf16>
    %c13 = arith.constant 13 : index
    %c0_56 = arith.constant 0 : index
    %152 = vector.load %arg5[%c13, %c0_56] : memref<16x256xbf16, #tpu.memory_space<vmem>>, vector<1x256xbf16>
    %cst_57 = arith.constant 1.500000e+00 : bf16
    %153 = vector.broadcast %cst_57 : bf16 to vector<16x256xbf16>
    %154 = arith.subf %151, %153 : vector<16x256xbf16>
    %155 = vector.broadcast %152 : vector<1x256xbf16> to vector<16x256xbf16>
    %156 = arith.mulf %154, %155 : vector<16x256xbf16>
    %c208 = arith.constant 208 : index
    %c0_58 = arith.constant 0 : index
    %157 = vector.load %arg8[%c208, %c0_58] : memref<256x256xbf16, #tpu.memory_space<vmem>>, vector<16x256xbf16>
    tpu.vector_store %arg8[%c208, %c0_58], %156 {strides = array<i32>} : memref<256x256xbf16, #tpu.memory_space<vmem>>, vector<16x256xbf16>,
    %c28_i32 = arith.constant 28 : i32
    %158 = vector.broadcast %c28_i32 : i32 to vector<16x256xi32>
    %159 = arith.shrsi %3, %158 : vector<16x256xi32>
    %c3_i32_59 = arith.constant 3 : i32
    %160 = vector.broadcast %c3_i32_59 : i32 to vector<16x256xi32>
    %161 = arith.andi %159, %160 : vector<16x256xi32>
    %162 = arith.sitofp %161 : vector<16x256xi32> to vector<16x256xbf16>
    %c14 = arith.constant 14 : index
    %c0_60 = arith.constant 0 : index
    %163 = vector.load %arg5[%c14, %c0_60] : memref<16x256xbf16, #tpu.memory_space<vmem>>, vector<1x256xbf16>
    %cst_61 = arith.constant 1.500000e+00 : bf16
    %164 = vector.broadcast %cst_61 : bf16 to vector<16x256xbf16>
    %165 = arith.subf %162, %164 : vector<16x256xbf16>
    %166 = vector.broadcast %163 : vector<1x256xbf16> to vector<16x256xbf16>
    %167 = arith.mulf %165, %166 : vector<16x256xbf16>
    %c224 = arith.constant 224 : index
    %c0_62 = arith.constant 0 : index
    %168 = vector.load %arg8[%c224, %c0_62] : memref<256x256xbf16, #tpu.memory_space<vmem>>, vector<16x256xbf16>
    tpu.vector_store %arg8[%c224, %c0_62], %167 {strides = array<i32>} : memref<256x256xbf16, #tpu.memory_space<vmem>>, vector<16x256xbf16>,
    %c30_i32 = arith.constant 30 : i32
    %169 = vector.broadcast %c30_i32 : i32 to vector<16x256xi32>
    %170 = arith.shrsi %3, %169 : vector<16x256xi32>
    %c3_i32_63 = arith.constant 3 : i32
    %171 = vector.broadcast %c3_i32_63 : i32 to vector<16x256xi32>
    %172 = arith.andi %170, %171 : vector<16x256xi32>
    %173 = arith.sitofp %172 : vector<16x256xi32> to vector<16x256xbf16>
    %c15 = arith.constant 15 : index
    %c0_64 = arith.constant 0 : index
    %174 = vector.load %arg5[%c15, %c0_64] : memref<16x256xbf16, #tpu.memory_space<vmem>>, vector<1x256xbf16>
    %cst_65 = arith.constant 1.500000e+00 : bf16
    %175 = vector.broadcast %cst_65 : bf16 to vector<16x256xbf16>
    %176 = arith.subf %173, %175 : vector<16x256xbf16>
    %177 = vector.broadcast %174 : vector<1x256xbf16> to vector<16x256xbf16>
    %178 = arith.mulf %176, %177 : vector<16x256xbf16>
    %c240 = arith.constant 240 : index
    %c0_66 = arith.constant 0 : index
    %179 = vector.load %arg8[%c240, %c0_66] : memref<256x256xbf16, #tpu.memory_space<vmem>>, vector<16x256xbf16>
    tpu.vector_store %arg8[%c240, %c0_66], %178 {strides = array<i32>} : memref<256x256xbf16, #tpu.memory_space<vmem>>, vector<16x256xbf16>,
    %c0_67 = arith.constant 0 : index
    %c0_68 = arith.constant 0 : index
    %180 = vector.load %arg7[%c0_67, %c0_68] : memref<16x256xf32, #tpu.memory_space<vmem>>, vector<16x256xf32>
    %c0_69 = arith.constant 0 : index
    %c0_70 = arith.constant 0 : index
    %181 = vector.load %arg3[%c0_69, %c0_70] : memref<16x256xbf16, #tpu.memory_space<vmem>>, vector<16x256xbf16>
    %c0_71 = arith.constant 0 : index
    %c0_72 = arith.constant 0 : index
    %182 = vector.load %arg8[%c0_71, %c0_72] : memref<256x256xbf16, #tpu.memory_space<vmem>>, vector<256x256xbf16>
    %cst_73 = arith.constant dense<0.000000e+00> : vector<16x256xf32>
    %183 = tpu.matmul %181, %182, %cst_73 {dimension_numbers = #tpu.dot_dimension_numbers<[1], [0], [0], [1], [0, 0, 1, 1], [], []>} : vector<16x256xbf16>, vector<256x256xbf16>, vector<16x256xf32> -> vector<16x256xf32>
    %184 = arith.addf %180, %183 : vector<16x256xf32>
    %c0_74 = arith.constant 0 : index
    %c0_75 = arith.constant 0 : index
    %185 = vector.load %arg7[%c0_74, %c0_75] : memref<16x256xf32, #tpu.memory_space<vmem>>, vector<16x256xf32>
    tpu.vector_store %arg7[%c0_74, %c0_75], %184 {strides = array<i32>} : memref<16x256xf32, #tpu.memory_space<vmem>>, vector<16x256xf32>,
    return
  }
  func.func @transform_0(%arg0: i32, %arg1: i32, %arg2: i32) -> (i32, i32) {
    %c0_i32 = arith.constant 0 : i32
    return %arg0, %arg2 : i32, i32
  }
  func.func @transform_1(%arg0: i32, %arg1: i32, %arg2: i32) -> (i32, i32) {
    %c0_i32 = arith.constant 0 : i32
    return %arg2, %arg1 : i32, i32
  }
  func.func @transform_2(%arg0: i32, %arg1: i32, %arg2: i32) -> (i32, i32) {
    %c0_i32 = arith.constant 0 : i32
    return %arg2, %arg1 : i32, i32
  }
  func.func @transform_3(%arg0: i32, %arg1: i32, %arg2: i32) -> (i32, i32) {
    %c0_i32 = arith.constant 0 : i32
    %c0_i32_0 = arith.constant 0 : i32
    return %c0_i32, %arg1 : i32, i32
  }
  func.func @transform_4(%arg0: i32, %arg1: i32, %arg2: i32) -> (i32, i32) {
    %c0_i32 = arith.constant 0 : i32
    return %arg0, %arg1 : i32, i32
  }
}

</mosaic_0001>

<llo_original>
// kernel: tpu_custom_call.1
$region0: #{tpu_custom_call.1}
  #allocation0 [shape = 'u32[]', space=smem, size = 0x4, offset = 0x4, fixed_abs, tag = 'smem constant byte address 0x4 - core index']
  #allocation1 [shape = 'u32[144,128]{1,0:T(1,128)}', space=vmem, size = 0x12000, scoped, tag = 'internal scratch']
  #allocation2 [shape = 'bf16[256,256]{1,0:T(8,128)(2,1)}', space=vmem, size = 0x20000, scoped, tag = 'scratch operand']
  %s0 = inlined_call_operand.hbm [shape: bf16[16,256], index: 0, kind: input, shape index: {}]
  %s1 = inlined_call_operand.hbm [shape: s32[16,256], index: 1, kind: input, shape index: {}]
  %s2 = inlined_call_operand.hbm [shape: bf16[16,256], index: 2, kind: input, shape index: {}]
  %s3 = inlined_call_operand.vmem [shape: f32[1,256], index: 3, kind: input, shape index: {}]
  %s4 = inlined_call_operand.hbm [shape: f32[16,256], index: 4, kind: output, shape index: {}]
  %s5 = sld [smem:[#allocation0]]
  $region42: #{tpu_custom_call.1} parent=0
    _
  %s7 = ssub.s32 1, %s5
  %s8 = scalar_select 0, %s7, %s5
  $region1: #{tpu_custom_call.1} parent=0
    #allocation3 [shape = 'u8[8192]{0}', space=vmem, size = 0x2000, scoped, tag = 'input window, operand 0, single buffered']
    #allocation4 [shape = 's32[1]{0}', space=sflag, size = 0x4, scoped, tag = 'scoped memory for tpu_custom_call.1']
    #allocation5 [shape = 's32[1]{0}', space=sflag, size = 0x4, scoped, tag = 'scoped memory for tpu_custom_call.1']
    #allocation6 [shape = 'u8[16384]{0}', space=vmem, size = 0x4000, scoped, tag = 'input window, operand 1, single buffered']
    #allocation7 [shape = 's32[1]{0}', space=sflag, size = 0x4, scoped, tag = 'scoped memory for tpu_custom_call.1']
    #allocation8 [shape = 'u8[8192]{0}', space=vmem, size = 0x2000, scoped, tag = 'input window, operand 2, single buffered']
    #allocation9 [shape = 'u8[16384]{0}', space=vmem, size = 0x4000, scoped, tag = 'output window, operand 0, single buffered']
    %9 = vsyncpa [#allocation4], 0
    %10 = vsyncpa [#allocation7], 0
    %11 = vsyncpa [#allocation5], 0
    // Predicated region
    $region2: #{tpu_custom_call.1} parent=1 // pred_check
      _
    $region3: #{tpu_custom_call.1} parent=1 // pred_check_branch
      %13 = sbr.rel (0) target = $region5
    $region4: #{tpu_custom_call.1} parent=1 // pred_region
      %s15 = ssub.s32 256, 256
      %16 = vsyncadd [#allocation4], %s15
      %s17 = sshll.u32 [#allocation3], 4
      %s18 = int_to_ptr.vmem [resolvable:$true] %s17
      %23 = dma.hbm_to_vmem [thread:$0]  %s0, 256, %s18, [#allocation4], 128, 128, 8
    $region5: #{tpu_custom_call.1} parent=1 // pred_fallthru
      _
    // Predicated region
    $region6: #{tpu_custom_call.1} parent=1 // pred_check
      _
    $region7: #{tpu_custom_call.1} parent=1 // pred_check_branch
      %25 = sbr.rel (0) target = $region9
    $region8: #{tpu_custom_call.1} parent=1 // pred_region
      %s27 = ssub.s32 512, 512
      %28 = vsyncadd [#allocation7], %s27
      %s29 = sshll.u32 [#allocation6], 4
      %s30 = int_to_ptr.vmem [resolvable:$true] %s29
      %35 = dma.hbm_to_vmem [thread:$0]  %s1, 512, %s30, [#allocation7], 256, 256, 16
    $region9: #{tpu_custom_call.1} parent=1 // pred_fallthru
      _
    // Predicated region
    $region10: #{tpu_custom_call.1} parent=1 // pred_check
      _
    $region11: #{tpu_custom_call.1} parent=1 // pred_check_branch
      %37 = sbr.rel (0) target = $region13
    $region12: #{tpu_custom_call.1} parent=1 // pred_region
      %s39 = ssub.s32 256, 256
      %40 = vsyncadd [#allocation7], %s39
      %s41 = sshll.u32 [#allocation8], 4
      %s42 = int_to_ptr.vmem [resolvable:$true] %s41
      %47 = dma.hbm_to_vmem [thread:$0]  %s2, 256, %s42, [#allocation7], 128, 128, 8
    $region13: #{tpu_custom_call.1} parent=1 // pred_fallthru
      _
    // Predicated region
    $region14: #{tpu_custom_call.1} parent=1 // pred_check
      _
    $region15: #{tpu_custom_call.1} parent=1 // pred_check_branch
      %49 = sbr.rel (0) target = $region17
    $region16: #{tpu_custom_call.1} parent=1 // pred_region
      _
    $region17: #{tpu_custom_call.1} parent=1 // pred_fallthru
      _
    // Predicated region
    $region18: #{tpu_custom_call.1} parent=1 // pred_check
      _
    $region19: #{tpu_custom_call.1} parent=1 // pred_check_branch
      %51 = sbr.rel (0) target = $region21
    $region20: #{tpu_custom_call.1} parent=1 // pred_region
      %52 = dma.done [#allocation4], 256
    $region21: #{tpu_custom_call.1} parent=1 // pred_fallthru
      _
    // Predicated region
    $region22: #{tpu_custom_call.1} parent=1 // pred_check
      _
    $region23: #{tpu_custom_call.1} parent=1 // pred_check_branch
      %54 = sbr.rel (0) target = $region25
    $region24: #{tpu_custom_call.1} parent=1 // pred_region
      %55 = dma.done [#allocation7], 512
    $region25: #{tpu_custom_call.1} parent=1 // pred_fallthru
      _
    // Predicated region
    $region26: #{tpu_custom_call.1} parent=1 // pred_check
      _
    $region27: #{tpu_custom_call.1} parent=1 // pred_check_branch
      %57 = sbr.rel (0) target = $region29
    $region28: #{tpu_custom_call.1} parent=1 // pred_region
      %58 = dma.done [#allocation7], 256
    $region29: #{tpu_custom_call.1} parent=1 // pred_fallthru
      _
    %p60 = scmp.eq.s32.totalorder 0, 0
    // Predicated region
    $region30: #{tpu_custom_call.1} parent=1 // pred_check
      %p61 = pneg %p60
    $region31: #{tpu_custom_call.1} parent=1 // pred_check_branch
      %63 = sbr.rel (%p61) target = $region33
    $region32: #{tpu_custom_call.1} parent=1 // pred_region
      %v64 = vld [vmem:[%s3] sm:$0x3]
      %v66 = vlaneseq
      %v67 = vshrl.u32 %v66, 7
      %v68 = vsub.s32 0, %v67
      %v69 = vrot.slane %v64, %v68
      %v70 = vlaneseq
      %v71 = vshrl.u32 %v70, 7
      %v72 = vsub.s32 1, %v71
      %v73 = vrot.slane %v64, %v72
      %76 = vst [vmem:[#allocation9] sm:$0xff] %v69
      %77 = vst [vmem:[#allocation9 + $0x8] sm:$0xff] %v73
      %78 = vst [vmem:[#allocation9 + $0x10] sm:$0xff] %v69
      %79 = vst [vmem:[#allocation9 + $0x18] sm:$0xff] %v73
    $region33: #{tpu_custom_call.1} parent=1 // pred_fallthru
      _
    %v80 = vld [vmem:[#allocation6] sm:$0xff]
    %v81 = vld [vmem:[#allocation6 + $0x8] sm:$0xff]
    %v82 = vld [vmem:[#allocation6 + $0x10] sm:$0xff]
    %v83 = vld [vmem:[#allocation6 + $0x18] sm:$0xff]
    %v84 = vand.u32 %v80, 3
    %v85 = vand.u32 %v81, 3
    %v86 = vand.u32 %v82, 3
    %v87 = vand.u32 %v83, 3
    %v88 = vcvt.s32.f32 %v84
    %v89 = vcvt.s32.f32 %v85
    %v90 = vcvt.s32.f32 %v86
    %v91 = vcvt.s32.f32 %v87
    %v92 = vpack.c.bf16 %v90, %v88
    %v93 = vpack.c.bf16 %v91, %v89
    %v94 = vld [vmem:[#allocation8] sm:$0x11]
    %v95 = vsub.bf16 %v92, 1069563840
    %v96 = vsub.bf16 %v93, 1069563840
    %v98 = vunpack.c.l.b16 %v94
    %v99 = vunpack.c.h.b16 %v94
    %v100 = vpack.c.b16 %v98, %v98
    %v101 = vpack.c.b16 %v99, %v99
    %v103 = vpack.i.b16 %v100, %v100
    %v105 = vlaneseq
    %v106 = vshrl.u32 %v105, 7
    %v107 = vsub.s32 0, %v106
    %v108 = vrot.slane %v103, %v107
    %v110 = vpack.i.b16 %v101, %v101
    %v112 = vlaneseq
    %v113 = vshrl.u32 %v112, 7
    %v114 = vsub.s32 0, %v113
    %v115 = vrot.slane %v110, %v114
    %v116 = vmul.bf16 %v95, %v108
    %v117 = vmul.bf16 %v96, %v115
    %v120 = vunpack.c.l.b16 %v116
    %v121 = vunpack.c.l.b16 %v117
    %v122 = vunpack.c.h.b16 %v116
    %v123 = vunpack.c.h.b16 %v117
    %v124 = vpack.c.b16 %v121, %v120
    %v125 = vpack.c.b16 %v123, %v122
    %128 = vst [vmem:[#allocation2] sm:$0xff] %v124
    %129 = vst [vmem:[#allocation2 + $0x8] sm:$0xff] %v125
    %v130 = vshra.s32 %v80, 2
    %v131 = vshra.s32 %v81, 2
    %v132 = vshra.s32 %v82, 2
    %v133 = vshra.s32 %v83, 2
    %v134 = vand.u32 %v130, 3
    %v135 = vand.u32 %v131, 3
    %v136 = vand.u32 %v132, 3
    %v137 = vand.u32 %v133, 3
    %v138 = vcvt.s32.f32 %v134
    %v139 = vcvt.s32.f32 %v135
    %v140 = vcvt.s32.f32 %v136
    %v141 = vcvt.s32.f32 %v137
    %v142 = vpack.c.bf16 %v140, %v138
    %v143 = vpack.c.bf16 %v141, %v139
    %v144 = vld [vmem:[#allocation8] sm:$0x11]
    %v145 = vsub.bf16 %v142, 1069563840
    %v146 = vsub.bf16 %v143, 1069563840
    %v148 = vunpack.c.l.b16 %v144
    %v149 = vunpack.c.h.b16 %v144
    %v150 = vpack.c.b16 %v148, %v148
    %v151 = vpack.c.b16 %v149, %v149
    %v153 = vshrl.u32 %v150, 16
    %v154 = vpack.i.b16 %v153, %v153
    %v156 = vlaneseq
    %v157 = vshrl.u32 %v156, 7
    %v158 = vsub.s32 0, %v157
    %v159 = vrot.slane %v154, %v158
    %v161 = vshrl.u32 %v151, 16
    %v162 = vpack.i.b16 %v161, %v161
    %v164 = vlaneseq
    %v165 = vshrl.u32 %v164, 7
    %v166 = vsub.s32 0, %v165
    %v167 = vrot.slane %v162, %v166
    %v168 = vmul.bf16 %v145, %v159
    %v169 = vmul.bf16 %v146, %v167
    %v172 = vunpack.c.l.b16 %v168
    %v173 = vunpack.c.l.b16 %v169
    %v174 = vunpack.c.h.b16 %v168
    %v175 = vunpack.c.h.b16 %v169
    %v176 = vpack.c.b16 %v173, %v172
    %v177 = vpack.c.b16 %v175, %v174
    %180 = vst [vmem:[#allocation2 + $0x10] sm:$0xff] %v176
    %181 = vst [vmem:[#allocation2 + $0x18] sm:$0xff] %v177
    %v182 = vshra.s32 %v80, 4
    %v183 = vshra.s32 %v81, 4
    %v184 = vshra.s32 %v82, 4
    %v185 = vshra.s32 %v83, 4
    %v186 = vand.u32 %v182, 3
    %v187 = vand.u32 %v183, 3
    %v188 = vand.u32 %v184, 3
    %v189 = vand.u32 %v185, 3
    %v190 = vcvt.s32.f32 %v186
    %v191 = vcvt.s32.f32 %v187
    %v192 = vcvt.s32.f32 %v188
    %v193 = vcvt.s32.f32 %v189
    %v194 = vpack.c.bf16 %v192, %v190
    %v195 = vpack.c.bf16 %v193, %v191
    %v196 = vld [vmem:[#allocation8] sm:$0x22]
    %v197 = vsub.bf16 %v194, 1069563840
    %v198 = vsub.bf16 %v195, 1069563840
    %v200 = vunpack.c.l.b16 %v196
    %v201 = vunpack.c.h.b16 %v196
    %v202 = vpack.c.b16 %v200, %v200
    %v203 = vpack.c.b16 %v201, %v201
    %v205 = vpack.i.b16 %v202, %v202
    %v207 = vlaneseq
    %v208 = vshrl.u32 %v207, 7
    %v209 = vsub.s32 1, %v208
    %v210 = vrot.slane %v205, %v209
    %v212 = vpack.i.b16 %v203, %v203
    %v214 = vlaneseq
    %v215 = vshrl.u32 %v214, 7
    %v216 = vsub.s32 1, %v215
    %v217 = vrot.slane %v212, %v216
    %v218 = vmul.bf16 %v197, %v210
    %v219 = vmul.bf16 %v198, %v217
    %v222 = vunpack.c.l.b16 %v218
    %v223 = vunpack.c.l.b16 %v219
    %v224 = vunpack.c.h.b16 %v218
    %v225 = vunpack.c.h.b16 %v219
    %v226 = vpack.c.b16 %v223, %v222
    %v227 = vpack.c.b16 %v225, %v224
    %230 = vst [vmem:[#allocation2 + $0x20] sm:$0xff] %v226
    %231 = vst [vmem:[#allocation2 + $0x28] sm:$0xff] %v227
    %v232 = vshra.s32 %v80, 6
    %v233 = vshra.s32 %v81, 6
    %v234 = vshra.s32 %v82, 6
    %v235 = vshra.s32 %v83, 6
    %v236 = vand.u32 %v232, 3
    %v237 = vand.u32 %v233, 3
    %v238 = vand.u32 %v234, 3
    %v239 = vand.u32 %v235, 3
    %v240 = vcvt.s32.f32 %v236
    %v241 = vcvt.s32.f32 %v237
    %v242 = vcvt.s32.f32 %v238
    %v243 = vcvt.s32.f32 %v239
    %v244 = vpack.c.bf16 %v242, %v240
    %v245 = vpack.c.bf16 %v243, %v241
    %v246 = vld [vmem:[#allocation8] sm:$0x22]
    %v247 = vsub.bf16 %v244, 1069563840
    %v248 = vsub.bf16 %v245, 1069563840
    %v250 = vunpack.c.l.b16 %v246
    %v251 = vunpack.c.h.b16 %v246
    %v252 = vpack.c.b16 %v250, %v250
    %v253 = vpack.c.b16 %v251, %v251
    %v255 = vshrl.u32 %v252, 16
    %v256 = vpack.i.b16 %v255, %v255
    %v258 = vlaneseq
    %v259 = vshrl.u32 %v258, 7
    %v260 = vsub.s32 1, %v259
    %v261 = vrot.slane %v256, %v260
    %v263 = vshrl.u32 %v253, 16
    %v264 = vpack.i.b16 %v263, %v263
    %v266 = vlaneseq
    %v267 = vshrl.u32 %v266, 7
    %v268 = vsub.s32 1, %v267
    %v269 = vrot.slane %v264, %v268
    %v270 = vmul.bf16 %v247, %v261
    %v271 = vmul.bf16 %v248, %v269
    %v274 = vunpack.c.l.b16 %v270
    %v275 = vunpack.c.l.b16 %v271
    %v276 = vunpack.c.h.b16 %v270
    %v277 = vunpack.c.h.b16 %v271
    %v278 = vpack.c.b16 %v275, %v274
    %v279 = vpack.c.b16 %v277, %v276
    %282 = vst [vmem:[#allocation2 + $0x30] sm:$0xff] %v278
    %283 = vst [vmem:[#allocation2 + $0x38] sm:$0xff] %v279
    %v284 = vshra.s32 %v80, 8
    %v285 = vshra.s32 %v81, 8
    %v286 = vshra.s32 %v82, 8
    %v287 = vshra.s32 %v83, 8
    %v288 = vand.u32 %v284, 3
    %v289 = vand.u32 %v285, 3
    %v290 = vand.u32 %v286, 3
    %v291 = vand.u32 %v287, 3
    %v292 = vcvt.s32.f32 %v288
    %v293 = vcvt.s32.f32 %v289
    %v294 = vcvt.s32.f32 %v290
    %v295 = vcvt.s32.f32 %v291
    %v296 = vpack.c.bf16 %v294, %v292
    %v297 = vpack.c.bf16 %v295, %v293
    %v298 = vld [vmem:[#allocation8] sm:$0x44]
    %v299 = vsub.bf16 %v296, 1069563840
    %v300 = vsub.bf16 %v297, 1069563840
    %v302 = vunpack.c.l.b16 %v298
    %v303 = vunpack.c.h.b16 %v298
    %v304 = vpack.c.b16 %v302, %v302
    %v305 = vpack.c.b16 %v303, %v303
    %v307 = vpack.i.b16 %v304, %v304
    %v309 = vlaneseq
    %v310 = vshrl.u32 %v309, 7
    %v311 = vsub.s32 2, %v310
    %v312 = vrot.slane %v307, %v311
    %v314 = vpack.i.b16 %v305, %v305
    %v316 = vlaneseq
    %v317 = vshrl.u32 %v316, 7
    %v318 = vsub.s32 2, %v317
    %v319 = vrot.slane %v314, %v318
    %v320 = vmul.bf16 %v299, %v312
    %v321 = vmul.bf16 %v300, %v319
    %v324 = vunpack.c.l.b16 %v320
    %v325 = vunpack.c.l.b16 %v321
    %v326 = vunpack.c.h.b16 %v320
    %v327 = vunpack.c.h.b16 %v321
    %v328 = vpack.c.b16 %v325, %v324
    %v329 = vpack.c.b16 %v327, %v326
    %332 = vst [vmem:[#allocation2 + $0x40] sm:$0xff] %v328
    %333 = vst [vmem:[#allocation2 + $0x48] sm:$0xff] %v329
    %v334 = vshra.s32 %v80, 10
    %v335 = vshra.s32 %v81, 10
    %v336 = vshra.s32 %v82, 10
    %v337 = vshra.s32 %v83, 10
    %v338 = vand.u32 %v334, 3
    %v339 = vand.u32 %v335, 3
    %v340 = vand.u32 %v336, 3
    %v341 = vand.u32 %v337, 3
    %v342 = vcvt.s32.f32 %v338
    %v343 = vcvt.s32.f32 %v339
    %v344 = vcvt.s32.f32 %v340
    %v345 = vcvt.s32.f32 %v341
    %v346 = vpack.c.bf16 %v344, %v342
    %v347 = vpack.c.bf16 %v345, %v343
    %v348 = vld [vmem:[#allocation8] sm:$0x44]
    %v349 = vsub.bf16 %v346, 1069563840
    %v350 = vsub.bf16 %v347, 1069563840
    %v352 = vunpack.c.l.b16 %v348
    %v353 = vunpack.c.h.b16 %v348
    %v354 = vpack.c.b16 %v352, %v352
    %v355 = vpack.c.b16 %v353, %v353
    %v357 = vshrl.u32 %v354, 16
    %v358 = vpack.i.b16 %v357, %v357
    %v360 = vlaneseq
    %v361 = vshrl.u32 %v360, 7
    %v362 = vsub.s32 2, %v361
    %v363 = vrot.slane %v358, %v362
    %v365 = vshrl.u32 %v355, 16
    %v366 = vpack.i.b16 %v365, %v365
    %v368 = vlaneseq
    %v369 = vshrl.u32 %v368, 7
    %v370 = vsub.s32 2, %v369
    %v371 = vrot.slane %v366, %v370
    %v372 = vmul.bf16 %v349, %v363
    %v373 = vmul.bf16 %v350, %v371
    %v376 = vunpack.c.l.b16 %v372
    %v377 = vunpack.c.l.b16 %v373
    %v378 = vunpack.c.h.b16 %v372
    %v379 = vunpack.c.h.b16 %v373
    %v380 = vpack.c.b16 %v377, %v376
    %v381 = vpack.c.b16 %v379, %v378
    %384 = vst [vmem:[#allocation2 + $0x50] sm:$0xff] %v380
    %385 = vst [vmem:[#allocation2 + $0x58] sm:$0xff] %v381
    %v386 = vshra.s32 %v80, 12
    %v387 = vshra.s32 %v81, 12
    %v388 = vshra.s32 %v82, 12
    %v389 = vshra.s32 %v83, 12
    %v390 = vand.u32 %v386, 3
    %v391 = vand.u32 %v387, 3
    %v392 = vand.u32 %v388, 3
    %v393 = vand.u32 %v389, 3
    %v394 = vcvt.s32.f32 %v390
    %v395 = vcvt.s32.f32 %v391
    %v396 = vcvt.s32.f32 %v392
    %v397 = vcvt.s32.f32 %v393
    %v398 = vpack.c.bf16 %v396, %v394
    %v399 = vpack.c.bf16 %v397, %v395
    %v400 = vld [vmem:[#allocation8] sm:$0x88]
    %v401 = vsub.bf16 %v398, 1069563840
    %v402 = vsub.bf16 %v399, 1069563840
    %v404 = vunpack.c.l.b16 %v400
    %v405 = vunpack.c.h.b16 %v400
    %v406 = vpack.c.b16 %v404, %v404
    %v407 = vpack.c.b16 %v405, %v405
    %v409 = vpack.i.b16 %v406, %v406
    %v411 = vlaneseq
    %v412 = vshrl.u32 %v411, 7
    %v413 = vsub.s32 3, %v412
    %v414 = vrot.slane %v409, %v413
    %v416 = vpack.i.b16 %v407, %v407
    %v418 = vlaneseq
    %v419 = vshrl.u32 %v418, 7
    %v420 = vsub.s32 3, %v419
    %v421 = vrot.slane %v416, %v420
    %v422 = vmul.bf16 %v401, %v414
    %v423 = vmul.bf16 %v402, %v421
    %v426 = vunpack.c.l.b16 %v422
    %v427 = vunpack.c.l.b16 %v423
    %v428 = vunpack.c.h.b16 %v422
    %v429 = vunpack.c.h.b16 %v423
    %v430 = vpack.c.b16 %v427, %v426
    %v431 = vpack.c.b16 %v429, %v428
    %434 = vst [vmem:[#allocation2 + $0x60] sm:$0xff] %v430
    %435 = vst [vmem:[#allocation2 + $0x68] sm:$0xff] %v431
    %v436 = vshra.s32 %v80, 14
    %v437 = vshra.s32 %v81, 14
    %v438 = vshra.s32 %v82, 14
    %v439 = vshra.s32 %v83, 14
    %v440 = vand.u32 %v436, 3
    %v441 = vand.u32 %v437, 3
    %v442 = vand.u32 %v438, 3
    %v443 = vand.u32 %v439, 3
    %v444 = vcvt.s32.f32 %v440
    %v445 = vcvt.s32.f32 %v441
    %v446 = vcvt.s32.f32 %v442
    %v447 = vcvt.s32.f32 %v443
    %v448 = vpack.c.bf16 %v446, %v444
    %v449 = vpack.c.bf16 %v447, %v445
    %v450 = vld [vmem:[#allocation8] sm:$0x88]
    %v451 = vsub.bf16 %v448, 1069563840
    %v452 = vsub.bf16 %v449, 1069563840
    %v454 = vunpack.c.l.b16 %v450
    %v455 = vunpack.c.h.b16 %v450
    %v456 = vpack.c.b16 %v454, %v454
    %v457 = vpack.c.b16 %v455, %v455
    %v459 = vshrl.u32 %v456, 16
    %v460 = vpack.i.b16 %v459, %v459
    %v462 = vlaneseq
    %v463 = vshrl.u32 %v462, 7
    %v464 = vsub.s32 3, %v463
    %v465 = vrot.slane %v460, %v464
    %v467 = vshrl.u32 %v457, 16
    %v468 = vpack.i.b16 %v467, %v467
    %v470 = vlaneseq
    %v471 = vshrl.u32 %v470, 7
    %v472 = vsub.s32 3, %v471
    %v473 = vrot.slane %v468, %v472
    %v474 = vmul.bf16 %v451, %v465
    %v475 = vmul.bf16 %v452, %v473
    %v478 = vunpack.c.l.b16 %v474
    %v479 = vunpack.c.l.b16 %v475
    %v480 = vunpack.c.h.b16 %v474
    %v481 = vunpack.c.h.b16 %v475
    %v482 = vpack.c.b16 %v479, %v478
    %v483 = vpack.c.b16 %v481, %v480
    %486 = vst [vmem:[#allocation2 + $0x70] sm:$0xff] %v482
    %487 = vst [vmem:[#allocation2 + $0x78] sm:$0xff] %v483
    %v488 = vshra.s32 %v80, 16
    %v489 = vshra.s32 %v81, 16
    %v490 = vshra.s32 %v82, 16
    %v491 = vshra.s32 %v83, 16
    %v492 = vand.u32 %v488, 3
    %v493 = vand.u32 %v489, 3
    %v494 = vand.u32 %v490, 3
    %v495 = vand.u32 %v491, 3
    %v496 = vcvt.s32.f32 %v492
    %v497 = vcvt.s32.f32 %v493
    %v498 = vcvt.s32.f32 %v494
    %v499 = vcvt.s32.f32 %v495
    %v500 = vpack.c.bf16 %v498, %v496
    %v501 = vpack.c.bf16 %v499, %v497
    %v502 = vld [vmem:[#allocation8 + $0x8] sm:$0x11]
    %v503 = vsub.bf16 %v500, 1069563840
    %v504 = vsub.bf16 %v501, 1069563840
    %v506 = vunpack.c.l.b16 %v502
    %v507 = vunpack.c.h.b16 %v502
    %v508 = vpack.c.b16 %v506, %v506
    %v509 = vpack.c.b16 %v507, %v507
    %v511 = vpack.i.b16 %v508, %v508
    %v513 = vlaneseq
    %v514 = vshrl.u32 %v513, 7
    %v515 = vsub.s32 0, %v514
    %v516 = vrot.slane %v511, %v515
    %v518 = vpack.i.b16 %v509, %v509
    %v520 = vlaneseq
    %v521 = vshrl.u32 %v520, 7
    %v522 = vsub.s32 0, %v521
    %v523 = vrot.slane %v518, %v522
    %v524 = vmul.bf16 %v503, %v516
    %v525 = vmul.bf16 %v504, %v523
    %v528 = vunpack.c.l.b16 %v524
    %v529 = vunpack.c.l.b16 %v525
    %v530 = vunpack.c.h.b16 %v524
    %v531 = vunpack.c.h.b16 %v525
    %v532 = vpack.c.b16 %v529, %v528
    %v533 = vpack.c.b16 %v531, %v530
    %536 = vst [vmem:[#allocation2 + $0x80] sm:$0xff] %v532
    %537 = vst [vmem:[#allocation2 + $0x88] sm:$0xff] %v533
    %v538 = vshra.s32 %v80, 18
    %v539 = vshra.s32 %v81, 18
    %v540 = vshra.s32 %v82, 18
    %v541 = vshra.s32 %v83, 18
    %v542 = vand.u32 %v538, 3
    %v543 = vand.u32 %v539, 3
    %v544 = vand.u32 %v540, 3
    %v545 = vand.u32 %v541, 3
    %v546 = vcvt.s32.f32 %v542
    %v547 = vcvt.s32.f32 %v543
    %v548 = vcvt.s32.f32 %v544
    %v549 = vcvt.s32.f32 %v545
    %v550 = vpack.c.bf16 %v548, %v546
    %v551 = vpack.c.bf16 %v549, %v547
    %v552 = vld [vmem:[#allocation8 + $0x8] sm:$0x11]
    %v553 = vsub.bf16 %v550, 1069563840
    %v554 = vsub.bf16 %v551, 1069563840
    %v556 = vunpack.c.l.b16 %v552
    %v557 = vunpack.c.h.b16 %v552
    %v558 = vpack.c.b16 %v556, %v556
    %v559 = vpack.c.b16 %v557, %v557
    %v561 = vshrl.u32 %v558, 16
    %v562 = vpack.i.b16 %v561, %v561
    %v564 = vlaneseq
    %v565 = vshrl.u32 %v564, 7
    %v566 = vsub.s32 0, %v565
    %v567 = vrot.slane %v562, %v566
    %v569 = vshrl.u32 %v559, 16
    %v570 = vpack.i.b16 %v569, %v569
    %v572 = vlaneseq
    %v573 = vshrl.u32 %v572, 7
    %v574 = vsub.s32 0, %v573
    %v575 = vrot.slane %v570, %v574
    %v576 = vmul.bf16 %v553, %v567
    %v577 = vmul.bf16 %v554, %v575
    %v580 = vunpack.c.l.b16 %v576
    %v581 = vunpack.c.l.b16 %v577
    %v582 = vunpack.c.h.b16 %v576
    %v583 = vunpack.c.h.b16 %v577
    %v584 = vpack.c.b16 %v581, %v580
    %v585 = vpack.c.b16 %v583, %v582
    %588 = vst [vmem:[#allocation2 + $0x90] sm:$0xff] %v584
    %589 = vst [vmem:[#allocation2 + $0x98] sm:$0xff] %v585
    %v590 = vshra.s32 %v80, 20
    %v591 = vshra.s32 %v81, 20
    %v592 = vshra.s32 %v82, 20
    %v593 = vshra.s32 %v83, 20
    %v594 = vand.u32 %v590, 3
    %v595 = vand.u32 %v591, 3
    %v596 = vand.u32 %v592, 3
    %v597 = vand.u32 %v593, 3
    %v598 = vcvt.s32.f32 %v594
    %v599 = vcvt.s32.f32 %v595
    %v600 = vcvt.s32.f32 %v596
    %v601 = vcvt.s32.f32 %v597
    %v602 = vpack.c.bf16 %v600, %v598
    %v603 = vpack.c.bf16 %v601, %v599
    %v604 = vld [vmem:[#allocation8 + $0x8] sm:$0x22]
    %v605 = vsub.bf16 %v602, 1069563840
    %v606 = vsub.bf16 %v603, 1069563840
    %v608 = vunpack.c.l.b16 %v604
    %v609 = vunpack.c.h.b16 %v604
    %v610 = vpack.c.b16 %v608, %v608
    %v611 = vpack.c.b16 %v609, %v609
    %v613 = vpack.i.b16 %v610, %v610
    %v615 = vlaneseq
    %v616 = vshrl.u32 %v615, 7
    %v617 = vsub.s32 1, %v616
    %v618 = vrot.slane %v613, %v617
    %v620 = vpack.i.b16 %v611, %v611
    %v622 = vlaneseq
    %v623 = vshrl.u32 %v622, 7
    %v624 = vsub.s32 1, %v623
    %v625 = vrot.slane %v620, %v624
    %v626 = vmul.bf16 %v605, %v618
    %v627 = vmul.bf16 %v606, %v625
    %v630 = vunpack.c.l.b16 %v626
    %v631 = vunpack.c.l.b16 %v627
    %v632 = vunpack.c.h.b16 %v626
    %v633 = vunpack.c.h.b16 %v627
    %v634 = vpack.c.b16 %v631, %v630
    %v635 = vpack.c.b16 %v633, %v632
    %638 = vst [vmem:[#allocation2 + $0xa0] sm:$0xff] %v634
    %639 = vst [vmem:[#allocation2 + $0xa8] sm:$0xff] %v635
    %v640 = vshra.s32 %v80, 22
    %v641 = vshra.s32 %v81, 22
    %v642 = vshra.s32 %v82, 22
    %v643 = vshra.s32 %v83, 22
    %v644 = vand.u32 %v640, 3
    %v645 = vand.u32 %v641, 3
    %v646 = vand.u32 %v642, 3
    %v647 = vand.u32 %v643, 3
    %v648 = vcvt.s32.f32 %v644
    %v649 = vcvt.s32.f32 %v645
    %v650 = vcvt.s32.f32 %v646
    %v651 = vcvt.s32.f32 %v647
    %v652 = vpack.c.bf16 %v650, %v648
    %v653 = vpack.c.bf16 %v651, %v649
    %v654 = vld [vmem:[#allocation8 + $0x8] sm:$0x22]
    %v655 = vsub.bf16 %v652, 1069563840
    %v656 = vsub.bf16 %v653, 1069563840
    %v658 = vunpack.c.l.b16 %v654
    %v659 = vunpack.c.h.b16 %v654
    %v660 = vpack.c.b16 %v658, %v658
    %v661 = vpack.c.b16 %v659, %v659
    %v663 = vshrl.u32 %v660, 16
    %v664 = vpack.i.b16 %v663, %v663
    %v666 = vlaneseq
    %v667 = vshrl.u32 %v666, 7
    %v668 = vsub.s32 1, %v667
    %v669 = vrot.slane %v664, %v668
    %v671 = vshrl.u32 %v661, 16
    %v672 = vpack.i.b16 %v671, %v671
    %v674 = vlaneseq
    %v675 = vshrl.u32 %v674, 7
    %v676 = vsub.s32 1, %v675
    %v677 = vrot.slane %v672, %v676
    %v678 = vmul.bf16 %v655, %v669
    %v679 = vmul.bf16 %v656, %v677
    %v682 = vunpack.c.l.b16 %v678
    %v683 = vunpack.c.l.b16 %v679
    %v684 = vunpack.c.h.b16 %v678
    %v685 = vunpack.c.h.b16 %v679
    %v686 = vpack.c.b16 %v683, %v682
    %v687 = vpack.c.b16 %v685, %v684
    %690 = vst [vmem:[#allocation2 + $0xb0] sm:$0xff] %v686
    %691 = vst [vmem:[#allocation2 + $0xb8] sm:$0xff] %v687
    %v692 = vshra.s32 %v80, 24
    %v693 = vshra.s32 %v81, 24
    %v694 = vshra.s32 %v82, 24
    %v695 = vshra.s32 %v83, 24
    %v696 = vand.u32 %v692, 3
    %v697 = vand.u32 %v693, 3
    %v698 = vand.u32 %v694, 3
    %v699 = vand.u32 %v695, 3
    %v700 = vcvt.s32.f32 %v696
    %v701 = vcvt.s32.f32 %v697
    %v702 = vcvt.s32.f32 %v698
    %v703 = vcvt.s32.f32 %v699
    %v704 = vpack.c.bf16 %v702, %v700
    %v705 = vpack.c.bf16 %v703, %v701
    %v706 = vld [vmem:[#allocation8 + $0x8] sm:$0x44]
    %v707 = vsub.bf16 %v704, 1069563840
    %v708 = vsub.bf16 %v705, 1069563840
    %v710 = vunpack.c.l.b16 %v706
    %v711 = vunpack.c.h.b16 %v706
    %v712 = vpack.c.b16 %v710, %v710
    %v713 = vpack.c.b16 %v711, %v711
    %v715 = vpack.i.b16 %v712, %v712
    %v717 = vlaneseq
    %v718 = vshrl.u32 %v717, 7
    %v719 = vsub.s32 2, %v718
    %v720 = vrot.slane %v715, %v719
    %v722 = vpack.i.b16 %v713, %v713
    %v724 = vlaneseq
    %v725 = vshrl.u32 %v724, 7
    %v726 = vsub.s32 2, %v725
    %v727 = vrot.slane %v722, %v726
    %v728 = vmul.bf16 %v707, %v720
    %v729 = vmul.bf16 %v708, %v727
    %v732 = vunpack.c.l.b16 %v728
    %v733 = vunpack.c.l.b16 %v729
    %v734 = vunpack.c.h.b16 %v728
    %v735 = vunpack.c.h.b16 %v729
    %v736 = vpack.c.b16 %v733, %v732
    %v737 = vpack.c.b16 %v735, %v734
    %740 = vst [vmem:[#allocation2 + $0xc0] sm:$0xff] %v736
    %741 = vst [vmem:[#allocation2 + $0xc8] sm:$0xff] %v737
    %v742 = vshra.s32 %v80, 26
    %v743 = vshra.s32 %v81, 26
    %v744 = vshra.s32 %v82, 26
    %v745 = vshra.s32 %v83, 26
    %v746 = vand.u32 %v742, 3
    %v747 = vand.u32 %v743, 3
    %v748 = vand.u32 %v744, 3
    %v749 = vand.u32 %v745, 3
    %v750 = vcvt.s32.f32 %v746
    %v751 = vcvt.s32.f32 %v747
    %v752 = vcvt.s32.f32 %v748
    %v753 = vcvt.s32.f32 %v749
    %v754 = vpack.c.bf16 %v752, %v750
    %v755 = vpack.c.bf16 %v753, %v751
    %v756 = vld [vmem:[#allocation8 + $0x8] sm:$0x44]
    %v757 = vsub.bf16 %v754, 1069563840
    %v758 = vsub.bf16 %v755, 1069563840
    %v760 = vunpack.c.l.b16 %v756
    %v761 = vunpack.c.h.b16 %v756
    %v762 = vpack.c.b16 %v760, %v760
    %v763 = vpack.c.b16 %v761, %v761
    %v765 = vshrl.u32 %v762, 16
    %v766 = vpack.i.b16 %v765, %v765
    %v768 = vlaneseq
    %v769 = vshrl.u32 %v768, 7
    %v770 = vsub.s32 2, %v769
    %v771 = vrot.slane %v766, %v770
    %v773 = vshrl.u32 %v763, 16
    %v774 = vpack.i.b16 %v773, %v773
    %v776 = vlaneseq
    %v777 = vshrl.u32 %v776, 7
    %v778 = vsub.s32 2, %v777
    %v779 = vrot.slane %v774, %v778
    %v780 = vmul.bf16 %v757, %v771
    %v781 = vmul.bf16 %v758, %v779
    %v784 = vunpack.c.l.b16 %v780
    %v785 = vunpack.c.l.b16 %v781
    %v786 = vunpack.c.h.b16 %v780
    %v787 = vunpack.c.h.b16 %v781
    %v788 = vpack.c.b16 %v785, %v784
    %v789 = vpack.c.b16 %v787, %v786
    %792 = vst [vmem:[#allocation2 + $0xd0] sm:$0xff] %v788
    %793 = vst [vmem:[#allocation2 + $0xd8] sm:$0xff] %v789
    %v794 = vshra.s32 %v80, 28
    %v795 = vshra.s32 %v81, 28
    %v796 = vshra.s32 %v82, 28
    %v797 = vshra.s32 %v83, 28
    %v798 = vand.u32 %v794, 3
    %v799 = vand.u32 %v795, 3
    %v800 = vand.u32 %v796, 3
    %v801 = vand.u32 %v797, 3
    %v802 = vcvt.s32.f32 %v798
    %v803 = vcvt.s32.f32 %v799
    %v804 = vcvt.s32.f32 %v800
    %v805 = vcvt.s32.f32 %v801
    %v806 = vpack.c.bf16 %v804, %v802
    %v807 = vpack.c.bf16 %v805, %v803
    %v808 = vld [vmem:[#allocation8 + $0x8] sm:$0x88]
    %v809 = vsub.bf16 %v806, 1069563840
    %v810 = vsub.bf16 %v807, 1069563840
    %v812 = vunpack.c.l.b16 %v808
    %v813 = vunpack.c.h.b16 %v808
    %v814 = vpack.c.b16 %v812, %v812
    %v815 = vpack.c.b16 %v813, %v813
    %v817 = vpack.i.b16 %v814, %v814
    %v819 = vlaneseq
    %v820 = vshrl.u32 %v819, 7
    %v821 = vsub.s32 3, %v820
    %v822 = vrot.slane %v817, %v821
    %v824 = vpack.i.b16 %v815, %v815
    %v826 = vlaneseq
    %v827 = vshrl.u32 %v826, 7
    %v828 = vsub.s32 3, %v827
    %v829 = vrot.slane %v824, %v828
    %v830 = vmul.bf16 %v809, %v822
    %v831 = vmul.bf16 %v810, %v829
    %v834 = vunpack.c.l.b16 %v830
    %v835 = vunpack.c.l.b16 %v831
    %v836 = vunpack.c.h.b16 %v830
    %v837 = vunpack.c.h.b16 %v831
    %v838 = vpack.c.b16 %v835, %v834
    %v839 = vpack.c.b16 %v837, %v836
    %842 = vst [vmem:[#allocation2 + $0xe0] sm:$0xff] %v838
    %843 = vst [vmem:[#allocation2 + $0xe8] sm:$0xff] %v839
    %v844 = vshra.s32 %v80, 30
    %v845 = vshra.s32 %v81, 30
    %v846 = vshra.s32 %v82, 30
    %v847 = vshra.s32 %v83, 30
    %v848 = vand.u32 %v844, 3
    %v849 = vand.u32 %v845, 3
    %v850 = vand.u32 %v846, 3
    %v851 = vand.u32 %v847, 3
    %v852 = vcvt.s32.f32 %v848
    %v853 = vcvt.s32.f32 %v849
    %v854 = vcvt.s32.f32 %v850
    %v855 = vcvt.s32.f32 %v851
    %v856 = vpack.c.bf16 %v854, %v852
    %v857 = vpack.c.bf16 %v855, %v853
    %v858 = vld [vmem:[#allocation8 + $0x8] sm:$0x88]
    %v859 = vsub.bf16 %v856, 1069563840
    %v860 = vsub.bf16 %v857, 1069563840
    %v862 = vunpack.c.l.b16 %v858
    %v863 = vunpack.c.h.b16 %v858
    %v864 = vpack.c.b16 %v862, %v862
    %v865 = vpack.c.b16 %v863, %v863
    %v867 = vshrl.u32 %v864, 16
    %v868 = vpack.i.b16 %v867, %v867
    %v870 = vlaneseq
    %v871 = vshrl.u32 %v870, 7
    %v872 = vsub.s32 3, %v871
    %v873 = vrot.slane %v868, %v872
    %v875 = vshrl.u32 %v865, 16
    %v876 = vpack.i.b16 %v875, %v875
    %v878 = vlaneseq
    %v879 = vshrl.u32 %v878, 7
    %v880 = vsub.s32 3, %v879
    %v881 = vrot.slane %v876, %v880
    %v882 = vmul.bf16 %v859, %v873
    %v883 = vmul.bf16 %v860, %v881
    %v886 = vunpack.c.l.b16 %v882
    %v887 = vunpack.c.l.b16 %v883
    %v888 = vunpack.c.h.b16 %v882
    %v889 = vunpack.c.h.b16 %v883
    %v890 = vpack.c.b16 %v887, %v886
    %v891 = vpack.c.b16 %v889, %v888
    %894 = vst [vmem:[#allocation2 + $0xf0] sm:$0xff] %v890
    %895 = vst [vmem:[#allocation2 + $0xf8] sm:$0xff] %v891
    %v896 = vld [vmem:[#allocation9] sm:$0xff]
    %v897 = vld [vmem:[#allocation9 + $0x8] sm:$0xff]
    %v898 = vld [vmem:[#allocation9 + $0x10] sm:$0xff]
    %v899 = vld [vmem:[#allocation9 + $0x18] sm:$0xff]
    %v900 = vld [vmem:[#allocation3] sm:$0xff]
    %v901 = vld [vmem:[#allocation3 + $0x8] sm:$0xff]
    %v902 = vld [vmem:[#allocation2] sm:$0xff]
    %v903 = vld [vmem:[#allocation2 + $0x8] sm:$0xff]
    %v904 = vld [vmem:[#allocation2 + $0x10] sm:$0xff]
    %v905 = vld [vmem:[#allocation2 + $0x18] sm:$0xff]
    %v906 = vld [vmem:[#allocation2 + $0x20] sm:$0xff]
    %v907 = vld [vmem:[#allocation2 + $0x28] sm:$0xff]
    %v908 = vld [vmem:[#allocation2 + $0x30] sm:$0xff]
    %v909 = vld [vmem:[#allocation2 + $0x38] sm:$0xff]
    %v910 = vld [vmem:[#allocation2 + $0x40] sm:$0xff]
    %v911 = vld [vmem:[#allocation2 + $0x48] sm:$0xff]
    %v912 = vld [vmem:[#allocation2 + $0x50] sm:$0xff]
    %v913 = vld [vmem:[#allocation2 + $0x58] sm:$0xff]
    %v914 = vld [vmem:[#allocation2 + $0x60] sm:$0xff]
    %v915 = vld [vmem:[#allocation2 + $0x68] sm:$0xff]
    %v916 = vld [vmem:[#allocation2 + $0x70] sm:$0xff]
    %v917 = vld [vmem:[#allocation2 + $0x78] sm:$0xff]
    %v918 = vld [vmem:[#allocation2 + $0x80] sm:$0xff]
    %v919 = vld [vmem:[#allocation2 + $0x88] sm:$0xff]
    %v920 = vld [vmem:[#allocation2 + $0x90] sm:$0xff]
    %v921 = vld [vmem:[#allocation2 + $0x98] sm:$0xff]
    %v922 = vld [vmem:[#allocation2 + $0xa0] sm:$0xff]
    %v923 = vld [vmem:[#allocation2 + $0xa8] sm:$0xff]
    %v924 = vld [vmem:[#allocation2 + $0xb0] sm:$0xff]
    %v925 = vld [vmem:[#allocation2 + $0xb8] sm:$0xff]
    %v926 = vld [vmem:[#allocation2 + $0xc0] sm:$0xff]
    %v927 = vld [vmem:[#allocation2 + $0xc8] sm:$0xff]
    %v928 = vld [vmem:[#allocation2 + $0xd0] sm:$0xff]
    %v929 = vld [vmem:[#allocation2 + $0xd8] sm:$0xff]
    %v930 = vld [vmem:[#allocation2 + $0xe0] sm:$0xff]
    %v931 = vld [vmem:[#allocation2 + $0xe8] sm:$0xff]
    %v932 = vld [vmem:[#allocation2 + $0xf0] sm:$0xff]
    %v933 = vld [vmem:[#allocation2 + $0xf8] sm:$0xff]
    %v936 = vunpack.c.l.b16 %v900
    %v937 = vunpack.c.h.b16 %v900
    %v938 = vunpack.c.l.b16 %v901
    %v939 = vunpack.c.h.b16 %v901
    %v940 = vpack.c.b16 %v938, %v936
    %v941 = vpack.c.b16 %v939, %v937
    %v976 = vunpack.c.l.b16 %v902
    %v977 = vunpack.c.h.b16 %v902
    %v978 = vunpack.c.l.b16 %v903
    %v979 = vunpack.c.h.b16 %v903
    %v980 = vunpack.c.l.b16 %v904
    %v981 = vunpack.c.h.b16 %v904
    %v982 = vunpack.c.l.b16 %v905
    %v983 = vunpack.c.h.b16 %v905
    %v984 = vunpack.c.l.b16 %v906
    %v985 = vunpack.c.h.b16 %v906
    %v986 = vunpack.c.l.b16 %v907
    %v987 = vunpack.c.h.b16 %v907
    %v988 = vunpack.c.l.b16 %v908
    %v989 = vunpack.c.h.b16 %v908
    %v990 = vunpack.c.l.b16 %v909
    %v991 = vunpack.c.h.b16 %v909
    %v992 = vunpack.c.l.b16 %v910
    %v993 = vunpack.c.h.b16 %v910
    %v994 = vunpack.c.l.b16 %v911
    %v995 = vunpack.c.h.b16 %v911
    %v996 = vunpack.c.l.b16 %v912
    %v997 = vunpack.c.h.b16 %v912
    %v998 = vunpack.c.l.b16 %v913
    %v999 = vunpack.c.h.b16 %v913
    %v1000 = vunpack.c.l.b16 %v914
    %v1001 = vunpack.c.h.b16 %v914
    %v1002 = vunpack.c.l.b16 %v915
    %v1003 = vunpack.c.h.b16 %v915
    %v1004 = vunpack.c.l.b16 %v916
    %v1005 = vunpack.c.h.b16 %v916
    %v1006 = vunpack.c.l.b16 %v917
    %v1007 = vunpack.c.h.b16 %v917
    %v1008 = vunpack.c.l.b16 %v918
    %v1009 = vunpack.c.h.b16 %v918
    %v1010 = vunpack.c.l.b16 %v919
    %v1011 = vunpack.c.h.b16 %v919
    %v1012 = vunpack.c.l.b16 %v920
    %v1013 = vunpack.c.h.b16 %v920
    %v1014 = vunpack.c.l.b16 %v921
    %v1015 = vunpack.c.h.b16 %v921
    %v1016 = vunpack.c.l.b16 %v922
    %v1017 = vunpack.c.h.b16 %v922
    %v1018 = vunpack.c.l.b16 %v923
    %v1019 = vunpack.c.h.b16 %v923
    %v1020 = vunpack.c.l.b16 %v924
    %v1021 = vunpack.c.h.b16 %v924
    %v1022 = vunpack.c.l.b16 %v925
    %v1023 = vunpack.c.h.b16 %v925
    %v1024 = vunpack.c.l.b16 %v926
    %v1025 = vunpack.c.h.b16 %v926
    %v1026 = vunpack.c.l.b16 %v927
    %v1027 = vunpack.c.h.b16 %v927
    %v1028 = vunpack.c.l.b16 %v928
    %v1029 = vunpack.c.h.b16 %v928
    %v1030 = vunpack.c.l.b16 %v929
    %v1031 = vunpack.c.h.b16 %v929
    %v1032 = vunpack.c.l.b16 %v930
    %v1033 = vunpack.c.h.b16 %v930
    %v1034 = vunpack.c.l.b16 %v931
    %v1035 = vunpack.c.h.b16 %v931
    %v1036 = vunpack.c.l.b16 %v932
    %v1037 = vunpack.c.h.b16 %v932
    %v1038 = vunpack.c.l.b16 %v933
    %v1039 = vunpack.c.h.b16 %v933
    %v1040 = vpack.c.b16 %v978, %v976
    %v1041 = vpack.c.b16 %v979, %v977
    %v1042 = vpack.c.b16 %v982, %v980
    %v1043 = vpack.c.b16 %v983, %v981
    %v1044 = vpack.c.b16 %v986, %v984
    %v1045 = vpack.c.b16 %v987, %v985
    %v1046 = vpack.c.b16 %v990, %v988
    %v1047 = vpack.c.b16 %v991, %v989
    %v1048 = vpack.c.b16 %v994, %v992
    %v1049 = vpack.c.b16 %v995, %v993
    %v1050 = vpack.c.b16 %v998, %v996
    %v1051 = vpack.c.b16 %v999, %v997
    %v1052 = vpack.c.b16 %v1002, %v1000
    %v1053 = vpack.c.b16 %v1003, %v1001
    %v1054 = vpack.c.b16 %v1006, %v1004
    %v1055 = vpack.c.b16 %v1007, %v1005
    %v1056 = vpack.c.b16 %v1010, %v1008
    %v1057 = vpack.c.b16 %v1011, %v1009
    %v1058 = vpack.c.b16 %v1014, %v1012
    %v1059 = vpack.c.b16 %v1015, %v1013
    %v1060 = vpack.c.b16 %v1018, %v1016
    %v1061 = vpack.c.b16 %v1019, %v1017
    %v1062 = vpack.c.b16 %v1022, %v1020
    %v1063 = vpack.c.b16 %v1023, %v1021
    %v1064 = vpack.c.b16 %v1026, %v1024
    %v1065 = vpack.c.b16 %v1027, %v1025
    %v1066 = vpack.c.b16 %v1030, %v1028
    %v1067 = vpack.c.b16 %v1031, %v1029
    %v1068 = vpack.c.b16 %v1034, %v1032
    %v1069 = vpack.c.b16 %v1035, %v1033
    %v1070 = vpack.c.b16 %v1038, %v1036
    %v1071 = vpack.c.b16 %v1039, %v1037
    %1104 = vmatprep.subr.bf16.mxu0 %v1055
    %1105 = vmatpush1.bf16.msra.mxu0 %v1054
    %1106 = vmatprep.subr.bf16.mxu0 %v1053
    %1107 = vmatpush1.bf16.msra.mxu0 %v1052
    %1108 = vmatprep.subr.bf16.mxu0 %v1051
    %1109 = vmatpush1.bf16.msra.mxu0 %v1050
    %1110 = vmatprep.subr.bf16.mxu0 %v1049
    %1111 = vmatpush1.bf16.msra.mxu0 %v1048
    %1112 = vmatprep.subr.bf16.mxu0 %v1047
    %1113 = vmatpush1.bf16.msra.mxu0 %v1046
    %1114 = vmatprep.subr.bf16.mxu0 %v1045
    %1115 = vmatpush1.bf16.msra.mxu0 %v1044
    %1116 = vmatprep.subr.bf16.mxu0 %v1043
    %1117 = vmatpush1.bf16.msra.mxu0 %v1042
    %1118 = vmatprep.subr.bf16.mxu0 %v1041
    %1119 = vmatpush1.bf16.msra.mxu0 %v1040
    %1120 = vmatprep.subr.bf16.mxu0 %v1071
    %1121 = vmatpush2.bf16.msra.mxu0 %v1070
    %1122 = vmatprep.subr.bf16.mxu0 %v1069
    %1123 = vmatpush2.bf16.msra.mxu0 %v1068
    %1124 = vmatprep.subr.bf16.mxu0 %v1067
    %1125 = vmatpush2.bf16.msra.mxu0 %v1066
    %1126 = vmatprep.subr.bf16.mxu0 %v1065
    %1127 = vmatpush2.bf16.msra.mxu0 %v1064
    %1128 = vmatprep.subr.bf16.mxu0 %v1063
    %1129 = vmatpush2.bf16.msra.mxu0 %v1062
    %1130 = vmatprep.subr.bf16.mxu0 %v1061
    %1131 = vmatpush2.bf16.msra.mxu0 %v1060
    %1132 = vmatprep.subr.bf16.mxu0 %v1059
    %1133 = vmatpush2.bf16.msra.mxu0 %v1058
    %1134 = vmatprep.subr.bf16.mxu0 %v1057
    %1135 = vmatpush2.bf16.msra.mxu0 %v1056
    %1136 = vmatprep.mubr.bf16.mxu0 %v941
    %1137 = vmatmul.mubr.bf16.gmra.mxu0 %v940
    %v1138 = vpop.f32.mrf.mxu0
    %v1139 = vadd.f32 0.0, %v1138
    %v1140 = vpop.f32.mrf.mxu0
    %v1141 = vadd.f32 0.0, %v1140
    %v1142 = vpop.f32.mrf.mxu0
    %v1143 = vadd.f32 0.0, %v1142
    %v1144 = vpop.f32.mrf.mxu0
    %v1145 = vadd.f32 0.0, %v1144
    %1146 = vdwg.mxu0
    %v1147 = vadd.f32 %v896, %v1139
    %v1148 = vadd.f32 %v897, %v1141
    %v1149 = vadd.f32 %v898, %v1143
    %v1150 = vadd.f32 %v899, %v1145
    %1151 = vst [vmem:[#allocation9] sm:$0xff] %v1147
    %1152 = vst [vmem:[#allocation9 + $0x8] sm:$0xff] %v1148
    %1153 = vst [vmem:[#allocation9 + $0x10] sm:$0xff] %v1149
    %1154 = vst [vmem:[#allocation9 + $0x18] sm:$0xff] %v1150
    // Predicated region
    $region34: #{tpu_custom_call.1} parent=1 // pred_check
      _
    $region35: #{tpu_custom_call.1} parent=1 // pred_check_branch
      %1156 = sbr.rel (0) target = $region37
    $region36: #{tpu_custom_call.1} parent=1 // pred_region
      %s1158 = ssub.s32 512, 512
      %1159 = vsyncadd [#allocation5], %s1158
      %s1160 = sshll.u32 [#allocation9], 4
      %s1161 = int_to_ptr.vmem [resolvable:$true] %s1160
      %1166 = dma.vmem_to_hbm [thread:$0]  %s1161, 512, %s4, [#allocation5], 256, 256, 16
    $region37: #{tpu_custom_call.1} parent=1 // pred_fallthru
      _
    // Predicated region
    $region38: #{tpu_custom_call.1} parent=1 // pred_check
      _
    $region39: #{tpu_custom_call.1} parent=1 // pred_check_branch
      %1168 = sbr.rel (0) target = $region41
    $region40: #{tpu_custom_call.1} parent=1 // pred_region
      %1169 = dma.done [#allocation5], 512
    $region41: #{tpu_custom_call.1} parent=1 // pred_fallthru
      _
    %1170 = vsyncpa [#allocation4], 1
    %1171 = vsyncpa [#allocation7], 1
    %1172 = vsyncpa [#allocation5], 1

</llo_original>
